<compile_context>
chip_gen: v7x
topology: tpu7x:2x2x1
jax: 0.10.0
libtpu: 0.0.40
codegen_flags: <defaults>
</compile_context>

<pallas_src>
import functools

import jax
import jax.numpy as jnp
from jax.experimental import pallas as pl
from jax.experimental.pallas import tpu as pltpu

_LANE = 128
_MAX_TILE_ROWS = 2048  # 3 ch * 2048 * 128 * 4B = 3 MiB per input block


def _gray_world_kernel(x_ref, o_ref, acc_ref, *, eps, inv_hw, n_tiles):
    """Grid is (B, n_tiles): batch (parallel) x spatial tiles (arbitrary).

    x_ref   : (1, 3, tile_rows, 128) — one spatial tile of channels R,G,B.
    o_ref   : (1, 1, 1)              — per-batch loss, written on last tile.
    acc_ref : (3, 128) f32 scratch   — running per-channel partial sums.
    """
    t = pl.program_id(1)

    @pl.when(t == 0)
    def _init():
        acc_ref[...] = jnp.zeros_like(acc_ref)

    x = x_ref[0].astype(jnp.float32)          # (3, tile_rows, 128)
    acc_ref[...] += jnp.sum(x, axis=1)        # (3, 128) lane-wise partial sums

    @pl.when(t == n_tiles - 1)
    def _finalize():
        # Cross-lane reduce once per image, then scalar math + single sqrt.
        means = jnp.sum(acc_ref[...], axis=1, keepdims=True) * inv_hw  # (3, 1)
        m0 = means[0:1, :]
        m1 = means[1:2, :]
        m2 = means[2:3, :]
        d = (m0 - m1) ** 2 + (m1 - m2) ** 2 + (m2 - m0) ** 2           # (1, 1)
        o_ref[...] = jnp.sqrt(d + eps).reshape(1, 1, 1)


def gray_world_loss(pred, *, loss_weight=1.0, reduction="mean", eps=1e-8, size=256):
    """Pallas implementation of GrayWorldLoss.forward. Returns a scalar."""
    if reduction not in ("mean", "sum"):
        raise ValueError(f"Reduction must be 'mean' or 'sum', got {reduction}")
    del size  # unused in the reference forward (no resize actually happens)

    B, C, H, W = pred.shape
    assert C >= 3, "GrayWorldLoss expects at least 3 channels (R, G, B)."

    S = H * W
    rows = pl.cdiv(S, _LANE)
    if rows <= _MAX_TILE_ROWS:
        tile_rows = rows                       # full extent: allowed as-is
        total_rows = rows
    else:
        tile_rows = _MAX_TILE_ROWS             # multiple of 8 -> always legal
        total_rows = pl.cdiv(rows, _MAX_TILE_ROWS) * _MAX_TILE_ROWS
    n_tiles = total_rows // tile_rows
    s_pad = total_rows * _LANE

    # Free reshape for contiguous NCHW; pad with zeros only if the flattened
    # spatial extent is not lane/tile aligned (zeros do not perturb the sums,
    # the mean denominator stays exactly H*W).
    x = pred.reshape(B, C, S)
    if s_pad != S:
        # TODO(synk): the zero-pad costs one extra XLA pass over the input;
        # in-kernel tail masking would avoid it but relies on OOB-block reads.
        x = jnp.pad(x, ((0, 0), (0, 0), (0, s_pad - S)))
    x = x.reshape(B, C, total_rows, _LANE)

    kernel = functools.partial(
        _gray_world_kernel,
        eps=float(eps),
        inv_hw=1.0 / float(S),
        n_tiles=n_tiles,
    )

    per_batch = pl.pallas_call(
        kernel,
        out_shape=jax.ShapeDtypeStruct((B, 1, 1), jnp.float32),
        grid_spec=pltpu.PrefetchScalarGridSpec(
            num_scalar_prefetch=0,
            grid=(B, n_tiles),
            in_specs=[
                # Only the first 3 channels are fetched (channel block = 3,
                # block index fixed at 0); spatial tiles are lane-dense.
                pl.BlockSpec((1, 3, tile_rows, _LANE),
                             lambda b, t: (b, 0, t, 0)),
            ],
            out_specs=pl.BlockSpec((1, 1, 1), lambda b, t: (b, 0, 0)),
            scratch_shapes=[pltpu.VMEM((3, _LANE), jnp.float32)],
        ),
        compiler_params=pltpu.CompilerParams(
            # batch axis indexes distinct output blocks -> parallel (megacore);
            # spatial tile axis accumulates into scratch -> arbitrary (last).
            dimension_semantics=("parallel", "arbitrary"),
        ),
    )(x)

    per_batch = per_batch.reshape(B)
    loss = jnp.mean(per_batch) if reduction == "mean" else jnp.sum(per_batch)
    return jnp.asarray(loss_weight * loss, dtype=pred.dtype)


def _gray_world_loss_ref(pred, *, loss_weight=1.0, reduction="mean", eps=1e-8):
    """Pure-JAX reference mirroring the PyTorch forward."""
    channel_means = jnp.mean(pred, axis=(2, 3))
    diff_rg = (channel_means[:, 0] - channel_means[:, 1]) ** 2
    diff_gb = (channel_means[:, 1] - channel_means[:, 2]) ** 2
    diff_br = (channel_means[:, 2] - channel_means[:, 0]) ** 2
    loss = jnp.sqrt(diff_rg + diff_gb + diff_br + eps)
    loss = jnp.mean(loss) if reduction == "mean" else jnp.sum(loss)
    return loss_weight * loss


if __name__ == "__main__":
    key = jax.random.PRNGKey(0)
    B, C, H, W = 2, 4, 16, 16  # small NCHW input; only channels 0..2 contribute
    pred = jax.random.uniform(key, (B, C, H, W), dtype=jnp.float32)

    loss = gray_world_loss(pred, loss_weight=1.0, reduction="mean", eps=1e-8)
    jax.block_until_ready(loss)
    ref = _gray_world_loss_ref(pred, loss_weight=1.0, reduction="mean", eps=1e-8)
    assert jnp.allclose(loss, ref, rtol=1e-5, atol=1e-6), (loss, ref)

    # also exercise 'sum' reduction + non-unit weight
    loss_s = gray_world_loss(pred, loss_weight=0.5, reduction="sum", eps=1e-8)
    jax.block_until_ready(loss_s)
    ref_s = _gray_world_loss_ref(pred, loss_weight=0.5, reduction="sum", eps=1e-8)
    assert jnp.allclose(loss_s, ref_s, rtol=1e-5, atol=1e-6), (loss_s, ref_s)

    print("KERNEL_OK")
</pallas_src>

<mosaic_0001>
module attributes {stable_mosaic.version = 11 : i64} {
  func.func @_gray_world_kernel(%arg0: i32, %arg1: i32, %arg2: memref<1x3x2x128xf32, #tpu.memory_space<vmem>>, %arg3: memref<1x1x1xf32, #tpu.memory_space<vmem>>, %arg4: memref<3x128xf32, #tpu.memory_space<vmem>>) attributes {dimension_semantics = [#tpu.dimension_semantics<parallel>, #tpu.dimension_semantics<arbitrary>], iteration_bounds = array<i64: 2, 1>, scalar_prefetch = 0 : i64, scratch_operands = 1 : i64, tpu.core_type = #tpu.core_type<tc>, window_params = [{transform_indices = @transform_0, window_bounds = array<i64: 1, 3, 2, 128>}, {transform_indices = @transform_1, window_bounds = array<i64: 1, 1, 1>}]} {
    %c0_i32 = arith.constant 0 : i32
    %0 = arith.cmpi eq, %arg1, %c0_i32 : i32
    %1 = arith.extui %0 : i1 to i32
    %c0_i32_0 = arith.constant 0 : i32
    %2 = arith.cmpi ne, %1, %c0_i32_0 : i32
    scf.if %2 {
      %cst_10 = arith.constant 0.000000e+00 : f32
      %12 = vector.broadcast %cst_10 : f32 to vector<3x128xf32>
      %c0_11 = arith.constant 0 : index
      %c0_12 = arith.constant 0 : index
      %13 = vector.load %arg4[%c0_11, %c0_12] : memref<3x128xf32, #tpu.memory_space<vmem>>, vector<3x128xf32>
      tpu.vector_store %arg4[%c0_11, %c0_12], %12 {strides = array<i32>} : memref<3x128xf32, #tpu.memory_space<vmem>>, vector<3x128xf32>,
    } else {
    }
    %c0 = arith.constant 0 : index
    %c0_1 = arith.constant 0 : index
    %c0_2 = arith.constant 0 : index
    %c0_3 = arith.constant 0 : index
    %3 = vector.load %arg2[%c0, %c0_1, %c0_2, %c0_3] : memref<1x3x2x128xf32, #tpu.memory_space<vmem>>, vector<1x3x2x128xf32>
    %4 = vector.shape_cast %3 : vector<1x3x2x128xf32> to vector<3x2x128xf32>
    %c0_4 = arith.constant 0 : index
    %c0_5 = arith.constant 0 : index
    %5 = vector.load %arg4[%c0_4, %c0_5] : memref<3x128xf32, #tpu.memory_space<vmem>>, vector<3x128xf32>
    %cst = arith.constant dense<0.000000e+00> : vector<3x128xf32>
    %6 = vector.multi_reduction <add>, %4, %cst [1] : vector<3x2x128xf32> to vector<3x128xf32>
    %7 = arith.addf %5, %6 : vector<3x128xf32>
    %c0_6 = arith.constant 0 : index
    %c0_7 = arith.constant 0 : index
    %8 = vector.load %arg4[%c0_6, %c0_7] : memref<3x128xf32, #tpu.memory_space<vmem>>, vector<3x128xf32>
    tpu.vector_store %arg4[%c0_6, %c0_7], %7 {strides = array<i32>} : memref<3x128xf32, #tpu.memory_space<vmem>>, vector<3x128xf32>,
    %c0_i32_8 = arith.constant 0 : i32
    %9 = arith.cmpi eq, %arg1, %c0_i32_8 : i32
    %10 = arith.extui %9 : i1 to i32
    %c0_i32_9 = arith.constant 0 : i32
    %11 = arith.cmpi ne, %10, %c0_i32_9 : i32
    scf.if %11 {
      %c0_10 = arith.constant 0 : index
      %c0_11 = arith.constant 0 : index
      %12 = vector.load %arg4[%c0_10, %c0_11] : memref<3x128xf32, #tpu.memory_space<vmem>>, vector<3x128xf32>
      %cst_12 = arith.constant dense<0.000000e+00> : vector<3xf32>
      %13 = vector.multi_reduction <add>, %12, %cst_12 [1] : vector<3x128xf32> to vector<3xf32>
      %14 = vector.shape_cast %13 : vector<3xf32> to vector<3x1xf32>
      %cst_13 = arith.constant 3.906250e-03 : f32
      %15 = vector.broadcast %cst_13 : f32 to vector<3x1xf32>
      %16 = arith.mulf %14, %15 : vector<3x1xf32>
      %17 = vector.extract_strided_slice %16 {offsets = [0, 0], sizes = [1, 1], strides = [1, 1]} : vector<3x1xf32> to vector<1x1xf32>
      %18 = vector.extract_strided_slice %16 {offsets = [1, 0], sizes = [1, 1], strides = [1, 1]} : vector<3x1xf32> to vector<1x1xf32>
      %19 = vector.extract_strided_slice %16 {offsets = [2, 0], sizes = [1, 1], strides = [1, 1]} : vector<3x1xf32> to vector<1x1xf32>
      %20 = arith.subf %17, %18 : vector<1x1xf32>
      %21 = arith.mulf %20, %20 : vector<1x1xf32>
      %22 = arith.subf %18, %19 : vector<1x1xf32>
      %23 = arith.mulf %22, %22 : vector<1x1xf32>
      %24 = arith.addf %21, %23 : vector<1x1xf32>
      %25 = arith.subf %19, %17 : vector<1x1xf32>
      %26 = arith.mulf %25, %25 : vector<1x1xf32>
      %27 = arith.addf %24, %26 : vector<1x1xf32>
      %cst_14 = arith.constant 9.99999993E-9 : f32
      %28 = vector.broadcast %cst_14 : f32 to vector<1x1xf32>
      %29 = arith.addf %27, %28 : vector<1x1xf32>
      %30 = math.sqrt %29 : vector<1x1xf32>
      %31 = vector.shape_cast %30 : vector<1x1xf32> to vector<1x1x1xf32>
      %c0_15 = arith.constant 0 : index
      %c0_16 = arith.constant 0 : index
      %c0_17 = arith.constant 0 : index
      %32 = vector.load %arg3[%c0_15, %c0_16, %c0_17] : memref<1x1x1xf32, #tpu.memory_space<vmem>>, vector<1x1x1xf32>
      tpu.vector_store %arg3[%c0_15, %c0_16, %c0_17], %31 {strides = array<i32>} : memref<1x1x1xf32, #tpu.memory_space<vmem>>, vector<1x1x1xf32>,
    } else {
    }
    return
  }
  func.func @transform_0(%arg0: i32, %arg1: i32) -> (i32, i32, i32, i32) {
    %c0_i32 = arith.constant 0 : i32
    %c0_i32_0 = arith.constant 0 : i32
    %c0_i32_1 = arith.constant 0 : i32
    return %arg0, %c0_i32, %arg1, %c0_i32_0 : i32, i32, i32, i32
  }
  func.func @transform_1(%arg0: i32, %arg1: i32) -> (i32, i32, i32) {
    %c0_i32 = arith.constant 0 : i32
    %c0_i32_0 = arith.constant 0 : i32
    %c0_i32_1 = arith.constant 0 : i32
    return %arg0, %c0_i32, %c0_i32_0 : i32, i32, i32
  }
}

</mosaic_0001>

<llo_original>
// kernel: tpu_custom_call.1
$region0: #{tpu_custom_call.1}
  #allocation0 [shape = 'u32[]', space=smem, size = 0x4, offset = 0x4, fixed_abs, tag = 'smem constant byte address 0x4 - core index']
  #allocation1 [shape = 'u32[144,128]{1,0:T(1,128)}', space=vmem, size = 0x12000, scoped, tag = 'internal scratch']
  #allocation2 [shape = 'f32[3,128]{1,0:T(4,128)}', space=vmem, size = 0x800, scoped, tag = 'scratch operand']
  %s0 = inlined_call_operand.hbm [shape: f32[2,4,2,128], index: 0, kind: input, shape index: {}]
  %s1 = inlined_call_operand.vmem [shape: f32[2,1,1], index: 1, kind: output, shape index: {}]
  %s2 = sld [smem:[#allocation0]]
  $region49: #{tpu_custom_call.1} parent=0
    _
  %s4 = ssub.s32 1, %s2
  %s5 = scalar_select 0, %s4, %s2
  $region1: #{tpu_custom_call.1} parent=0
    #allocation3 [shape = 'u8[6144]{0}', space=vmem, size = 0x1800, scoped, tag = 'input window, operand 0']
    #allocation4 [shape = 's32[2]{0}', space=sflag, size = 0x8, scoped, tag = 'scoped memory for tpu_custom_call.1']
    %6 = vsyncpa [#allocation4], 0
    %s7 = scalar_lea.sflag [#allocation4], 1
    %8 = vsyncpa %s7, 0
    loop: start=0, step=1, limit=4
    $region2: #{tpu_custom_call.1} parent=1 // loop_pre_header
      _
    $region3: #{tpu_custom_call.1} parent=1 // loop_header
      %s10 = sphi 0, %s14
      %p11 = scmp.ge.s32.totalorder %s10, 4
      %s17 = sphi 0, %s29
      %s18 = sphi 0, %s25
      %s19 = sphi 0, %s17
      %s20 = sphi 0, %s18
      %s21 = sphi 0, %s19
      %s22 = sphi 0, %s20
      %s34 = sphi 0, %s36
      %s37 = sphi 0, %s34
      %s38 = sphi 0, %s37
      %s54 = sphi 0, %s38
      %s60 = sphi 0, %s62
      %s63 = sphi 0, %s60
      %s64 = sphi 0, %s63
      %s80 = sphi 0, %s64
    $region4: #{tpu_custom_call.1} parent=1 // loop_header_branch
      %13 = sbr.rel (%p11) target = $region8
    $region5: #{tpu_custom_call.1} parent=1 // loop_body
      %s15 = ssub.s32 %s10, 1
      %s16 = ssub.s32 %s10, 2
      %s23 = sadd.s32 1, %s18
      %p24 = scmp.ge.s32.totalorder %s23, 1
      %s25 = scalar_select %p24, 0, %s23
      %s26 = sadd.s32 1, %s17
      %s27 = scalar_select %p24, %s26, %s17
      %p28 = scmp.ge.s32.totalorder %s27, 2
      %s29 = scalar_select %p28, 0, %s27
      %s30 = ssub.s32 %s17, %s29
      %s31 = ssub.s32 %s18, %s25
      %s32 = sor.u32 %s30, %s31
      %p33 = scmp.eq.s32.totalorder %s32, 0
      %s35 = sadd.s32 %s34, 1
      %s36 = scalar_select %p33, %s34, %s35
      %p39 = pneg %p33
      %p40 = scmp.eq.s32.totalorder %s10, 1
      %p41 = por %p39, %p40
      %p42 = scmp.ne.s32.totalorder %s34, %s37
      %p43 = scmp.eq.s32.totalorder %s10, 0
      %p44 = por %p42, %p43
      %p45 = scmp.ne.s32.totalorder %s34, %s37
      %p46 = scmp.eq.s32.totalorder %s15, 1
      %p47 = por %p45, %p46
      %p48 = scmp.ne.s32.totalorder %s37, %s38
      %p49 = scmp.eq.s32.totalorder %s15, 0
      %p50 = por %p48, %p49
      %p51 = scmp.ne.s32.totalorder %s37, %s38
      %p52 = scmp.eq.s32.totalorder %s16, 1
      %p53 = por %p51, %p52
      %p55 = scmp.ne.s32.totalorder %s38, %s54
      %p56 = scmp.eq.s32.totalorder %s16, 0
      %p57 = por %p55, %p56
      %s58 = ssub.s32 %s17, %s29
      %p59 = scmp.eq.s32.totalorder %s58, 0
      %s61 = sadd.s32 %s60, 1
      %s62 = scalar_select %p59, %s60, %s61
      %p65 = pneg %p59
      %p66 = scmp.eq.s32.totalorder %s10, 1
      %p67 = por %p65, %p66
      %p68 = scmp.ne.s32.totalorder %s60, %s63
      %p69 = scmp.eq.s32.totalorder %s10, 0
      %p70 = por %p68, %p69
      %p71 = scmp.ne.s32.totalorder %s60, %s63
      %p72 = scmp.eq.s32.totalorder %s15, 1
      %p73 = por %p71, %p72
      %p74 = scmp.ne.s32.totalorder %s63, %s64
      %p75 = scmp.eq.s32.totalorder %s15, 0
      %p76 = por %p74, %p75
      %p77 = scmp.ne.s32.totalorder %s63, %s64
      %p78 = scmp.eq.s32.totalorder %s16, 1
      %p79 = por %p77, %p78
      %p81 = scmp.ne.s32.totalorder %s64, %s80
      %p82 = scmp.eq.s32.totalorder %s16, 0
      %p83 = por %p81, %p82
      %p84 = scmp.le.s32.totalorder 1, %s10
      %p85 = scmp.lt.s32.totalorder %s10, 3
      %p86 = pnand %p84, %p85
      %p87 = pneg %p86
      // Predicated region
      $region9: #{tpu_custom_call.1} parent=5 // pred_check
        _
      $region10: #{tpu_custom_call.1} parent=5 // pred_check_branch
        %89 = sbr.rel (%p86) target = $region12
      $region11: #{tpu_custom_call.1} parent=5 // pred_region
        %s90 = ssub.s32 %s10, 1
      $region12: #{tpu_custom_call.1} parent=5 // pred_fallthru
        _
      %p91 = scmp.lt.s32.totalorder %s10, 2
      // Predicated region
      $region13: #{tpu_custom_call.1} parent=5 // pred_check
        %p92 = pneg %p91
      $region14: #{tpu_custom_call.1} parent=5 // pred_check_branch
        %94 = sbr.rel (%p92) target = $region16
      $region15: #{tpu_custom_call.1} parent=5 // pred_region
        // Predicated region
        $region17: #{tpu_custom_call.1} parent=15 // pred_check
          %p95 = pneg %p44
        $region18: #{tpu_custom_call.1} parent=15 // pred_check_branch
          %97 = sbr.rel (%p95) target = $region20
        $region19: #{tpu_custom_call.1} parent=15 // pred_region
          %s98 = sand.u32 %s34, 1
          %s99 = scalar_lea.sflag [#allocation4], %s98
          %s100 = sand.u32 %s34, 1
          %s101 = smul.addr %s100, 6
          %s102 = scalar_lea.vmem [#allocation3], %s101
          %s104 = ssub.s32 96, 96
          %105 = vsyncadd %s99, %s104
          %s106 = smul.addr %s17, 4
          %s107 = sadd.s32 %s18, %s106
          %s108 = smul.addr %s107, 32
          %s109 = scalar_lea.hbm %s0, %s108
          %s110 = sshll.u32 %s102, 4
          %s111 = int_to_ptr.vmem [resolvable:$true] %s110
          %116 = dma.hbm_to_vmem [thread:$0]  %s109, 96, %s111, %s99, 32, 32, 2
        $region20: #{tpu_custom_call.1} parent=15 // pred_fallthru
          _
      $region16: #{tpu_custom_call.1} parent=5 // pred_fallthru
        _
      %p117 = scmp.le.s32.totalorder 1, %s10
      %p118 = scmp.lt.s32.totalorder %s10, 3
      %p119 = pnand %p117, %p118
      %p120 = pneg %p119
      // Predicated region
      $region21: #{tpu_custom_call.1} parent=5 // pred_check
        _
      $region22: #{tpu_custom_call.1} parent=5 // pred_check_branch
        %122 = sbr.rel (%p119) target = $region24
      $region23: #{tpu_custom_call.1} parent=5 // pred_region
        %s123 = ssub.s32 %s10, 1
        %s124 = sand.u32 %s37, 1
        %s125 = scalar_lea.sflag [#allocation4], %s124
        %s126 = sand.u32 %s37, 1
        %s127 = smul.addr %s126, 6
        %s128 = scalar_lea.vmem [#allocation3], %s127
        // Predicated region
        $region25: #{tpu_custom_call.1} parent=23 // pred_check
          %p129 = pneg %p50
        $region26: #{tpu_custom_call.1} parent=23 // pred_check_branch
          %131 = sbr.rel (%p129) target = $region28
        $region27: #{tpu_custom_call.1} parent=23 // pred_region
          %132 = dma.done %s125, 96
        $region28: #{tpu_custom_call.1} parent=23 // pred_fallthru
          _
        %s133 = sand.u32 %s37, 1
        %s134 = scalar_lea.sflag [#allocation4], %s133
        %s135 = sand.u32 %s37, 1
        %s136 = smul.addr %s135, 6
        %s137 = scalar_lea.vmem [#allocation3], %s136
        %p138 = pneg %p50
        %p139 = pneg %p47
        %p140 = pneg %p76
        %p141 = pneg %p73
        %p142 = scmp.lt.s32.totalorder %s19, 1
        %s143 = scalar_select %p142, %s19, 1
        %s144 = scalar_lea.vmem %s1, %s143
        %p145 = scmp.lt.s32.totalorder %s19, 1
        %s146 = scalar_select %p145, %s19, 1
        %s147 = scalar_lea.vmem %s1, %s146
        %p148 = scmp.eq.s32.totalorder %s20, 0
        // Predicated region
        $region29: #{tpu_custom_call.1} parent=23 // pred_check
          %p149 = pneg %p148
        $region30: #{tpu_custom_call.1} parent=23 // pred_check_branch
          %151 = sbr.rel (%p149) target = $region32
        $region31: #{tpu_custom_call.1} parent=23 // pred_region
          %152 = vst [vmem:[#allocation2] sm:$0x7] 0.0
        $region32: #{tpu_custom_call.1} parent=23 // pred_fallthru
          _
        %v153 = vld [vmem:[%s128] sm:$0x3]
        %v154 = vld [vmem:[%s128 + $0x2] sm:$0x3]
        %v155 = vld [vmem:[%s128 + $0x4] sm:$0x3]
        %v156 = vld [vmem:[#allocation2] sm:$0x7]
        %vm157 = vcmask 1041408
        %v158 = vsel %vm157, %v153, 0.0
        %v159 = vrot.slane %v158, 4
        %v160 = vadd.f32 %v158, %v159
        %v161 = vrot.slane %v160, 2
        %v162 = vadd.f32 %v160, %v161
        %v163 = vrot.slane %v162, 1
        %v164 = vadd.f32 %v162, %v163
        %v165 = vsel %vm157, %v154, 0.0
        %v166 = vrot.slane %v165, 4
        %v167 = vadd.f32 %v165, %v166
        %v168 = vrot.slane %v167, 2
        %v169 = vadd.f32 %v167, %v168
        %v170 = vrot.slane %v169, 1
        %v171 = vadd.f32 %v169, %v170
        %v172 = vsel %vm157, %v155, 0.0
        %v173 = vrot.slane %v172, 4
        %v174 = vadd.f32 %v172, %v173
        %v175 = vrot.slane %v174, 2
        %v176 = vadd.f32 %v174, %v175
        %v177 = vrot.slane %v176, 1
        %v178 = vadd.f32 %v176, %v177
        %vm182 = vcmask 1041409
        %v183 = vsel %vm182, %v171, %v164
        %vm184 = vcmask 1042434
        %v185 = vsel %vm184, %v178, %v183
        %v187 = vadd.f32 %v156, %v185
        %188 = vst [vmem:[#allocation2] sm:$0x7] %v187
        // Predicated region
        $region33: #{tpu_custom_call.1} parent=23 // pred_check
          %p189 = pneg %p148
        $region34: #{tpu_custom_call.1} parent=23 // pred_check_branch
          %191 = sbr.rel (%p189) target = $region36
        $region35: #{tpu_custom_call.1} parent=23 // pred_region
          %v192 = vld [vmem:[#allocation2] sm:$0x7]
          %vm193 = vcmask 1042432
          %v194 = vsel %vm193, %v192, 0.0
          %195 = vadd.xlane.f32.xlu0 %v194
          %v196 = vpop.xlane.xlu0 %195
          %v197 = vmul.f32 %v196, 0.00390625
          %v199 = vrot.slane %v197, 1
          %v201 = vsub.f32 %v197, %v199
          %v202 = vmul.f32 %v201, %v201
          %v204 = vrot.slane %v202, 1
          %v206 = vadd.f32 %v202, %v204
          %v207 = vrot.slane %v197, 6
          %v209 = vsub.f32 %v197, %v207
          %v210 = vmul.f32 %v209, %v209
          %v212 = vrot.slane %v210, 2
          %v214 = vadd.f32 %v206, %v212
          %v215 = vadd.f32 %v214, 1e-08
          %v216 = vrsqrt.pop %v215
          %v217 = vmul.f32 %v215, %v216
          %vm218 = vcmp.eq.f32.partialorder %v215, inf
          %v219 = vsel %vm218, %v215, %v217
          %vm220 = vcmp.eq.f32.partialorder %v215, 0.0
          %v221 = vand.u32 %v215, 2147483648
          %v222 = vsel %vm220, %v221, %v219
          %vm223 = vcmask 0
          %224 = vst.msk [vmem:[%s147] sm:$0x1] %vm223, %v222
        $region36: #{tpu_custom_call.1} parent=23 // pred_fallthru
          _
        %p225 = scmp.lt.s32.totalorder %s19, 1
        %s226 = scalar_select %p225, %s19, 1
        %s227 = scalar_lea.vmem %s1, %s226
        // Predicated region
        $region37: #{tpu_custom_call.1} parent=23 // pred_check
          %p228 = pneg %p73
        $region38: #{tpu_custom_call.1} parent=23 // pred_check_branch
          %230 = sbr.rel (%p228) target = $region40
        $region39: #{tpu_custom_call.1} parent=23 // pred_region
          _
        $region40: #{tpu_custom_call.1} parent=23 // pred_fallthru
          _
      $region24: #{tpu_custom_call.1} parent=5 // pred_fallthru
        _
      %p231 = scmp.le.s32.totalorder 2, %s10
      // Predicated region
      $region41: #{tpu_custom_call.1} parent=5 // pred_check
        %p232 = pneg %p231
      $region42: #{tpu_custom_call.1} parent=5 // pred_check_branch
        %234 = sbr.rel (%p232) target = $region44
      $region43: #{tpu_custom_call.1} parent=5 // pred_region
        %s235 = ssub.s32 %s10, 2
        // Predicated region
        $region45: #{tpu_custom_call.1} parent=43 // pred_check
          %p236 = pneg %p79
        $region46: #{tpu_custom_call.1} parent=43 // pred_check_branch
          %238 = sbr.rel (%p236) target = $region48
        $region47: #{tpu_custom_call.1} parent=43 // pred_region
          %p239 = scmp.lt.s32.totalorder %s21, 1
          %s240 = scalar_select %p239, %s21, 1
          %s241 = scalar_lea.vmem %s1, %s240
        $region48: #{tpu_custom_call.1} parent=43 // pred_fallthru
          _
      $region44: #{tpu_custom_call.1} parent=5 // pred_fallthru
        _
    $region6: #{tpu_custom_call.1} parent=1 // loop_footer
      %s14 = sadd.s32 1, %s10
    $region7: #{tpu_custom_call.1} parent=1 // loop_footer_branch
      %9 = sbr.rel target = $region3
    $region8: #{tpu_custom_call.1} parent=1 // loop_exit
      _
    %242 = vsyncpa [#allocation4], 1
    %s243 = scalar_lea.sflag [#allocation4], 1
    %244 = vsyncpa %s243, 1

</llo_original>
